<compile_context>
chip_gen: v7x
topology: tpu7x:2x2x1
jax: 0.10.0
libtpu: 0.0.40
codegen_flags: <defaults>
</compile_context>

<pallas_src>
import jax
import jax.numpy as jnp
from jax.experimental import pallas as pl
from jax.experimental.pallas import tpu as pltpu

_MiB = 1024 * 1024
_LANE = 128


def _round_up(n, m):
    return (n + m - 1) // m * m


def _tiled_bytes(shape, dtype):
    """Physical VMEM footprint of one block, honoring (sublane, 128) tile padding."""
    itemsize = jnp.dtype(dtype).itemsize
    sublane = max(8, 32 // itemsize)  # 8 (f32), 16 (bf16), 32 (int8/fp8)
    dims = list(shape)
    if dims:
        dims[-1] = _round_up(dims[-1], _LANE)
    if len(dims) >= 2:
        dims[-2] = _round_up(dims[-2], sublane)
    n = 1
    for d in dims:
        n *= d
    return n * itemsize


def _vmem_capacity_bytes():
    """Per-TensorCore VMEM capacity (v5e/v6e: 128 MiB, v7x: 64 MiB per TC)."""
    try:
        cap = int(pltpu.get_tpu_info().vmem_capacity_bytes)
        if cap > 0:
            return cap
    except Exception:
        pass
    return 64 * _MiB  # conservative default (v7x per-TensorCore)


def _tile_candidates(T):
    cands = [t for t in (1024, 512, 256, 128) if T % t == 0]
    cands.append(T)  # a block equal to the full dim is always legal
    return cands


def _mlp_kernel_resident(cat_ids_ref, x_ref, w1_ref, b1_ref, w2_ref, b2_ref,
                         out_ref):
    # x_ref:  (1, T_blk, D_in)             out_ref: (1, T_blk, Dp)
    # w1_ref: (C, D_in, Hp)   b1_ref: (C, 1, Hp)
    # w2_ref: (C, Hp, Dp)     b2_ref: (C, 1, Dp)
    c = cat_ids_ref[pl.program_id(0)]           # this batch row's category
    x = x_ref[0]                                # (T_blk, D_in)
    h = jnp.dot(x, w1_ref[c], preferred_element_type=jnp.float32)
    h = jnp.maximum(h + b1_ref[c], 0.0)         # bias add + ReLU in f32
    h = h.astype(x.dtype)
    y = jnp.dot(h, w2_ref[c], preferred_element_type=jnp.float32) + b2_ref[c]
    out_ref[0] = y.astype(out_ref.dtype)


def _mlp_kernel_streamed(cid_sorted_ref, order_ref, x_ref, w1_ref, b1_ref,
                         w2_ref, b2_ref, out_ref):
    # x_ref:  (1, T_blk, D_in)             out_ref: (1, T_blk, Dp)
    # w1_ref: (1, D_in, Hp)   b1_ref: (C, 1, Hp)   (biases stay resident)
    # w2_ref: (1, Hp, Dp)     b2_ref: (C, 1, Dp)
    del order_ref                               # consumed only by the index_maps
    c = cid_sorted_ref[pl.program_id(0)]
    x = x_ref[0]
    h = jnp.dot(x, w1_ref[0], preferred_element_type=jnp.float32)
    h = jnp.maximum(h + b1_ref[c], 0.0)
    h = h.astype(x.dtype)
    y = jnp.dot(h, w2_ref[0], preferred_element_type=jnp.float32) + b2_ref[c]
    out_ref[0] = y.astype(out_ref.dtype)


def category_specific_mlp(x, cat_ids, W1, b1, W2, b2,
                          compute_dtype=jnp.float32, force_path=None):
    """Pallas implementation of CategorySpecificMLP.forward.

    x: (B, T, D_in); cat_ids: (B,) int; W1: (C, D_in, H); b1: (C, H);
    W2: (C, H, D_out); b2: (C, D_out).  Returns (B, T, D_out) float32.

    compute_dtype: dtype fed to the MXU for x / W1 / W2 (accumulation is always
    f32; bias add / ReLU stay f32).  bfloat16 halves weight/activation DMA bytes
    and ~doubles MXU throughput on v6e/v7x at a small accuracy cost -- kept f32
    by default for exact parity with the PyTorch module.
    force_path: None | "resident" | "streamed" (testing hook).
    """
    B, T, D_in = x.shape
    C, _, H = W1.shape
    D_out = W2.shape[-1]
    out_dtype = jnp.float32

    cat_ids = cat_ids.astype(jnp.int32)
    x = x.astype(compute_dtype)
    W1 = W1.astype(compute_dtype)
    W2 = W2.astype(compute_dtype)
    b1 = b1.astype(jnp.float32)
    b2 = b2.astype(jnp.float32)

    # --- Pad H / D_out to lane multiples (128): lane-dense MXU feeds, unmasked
    # output stores.  Exact: padded columns/rows are zero and contribute nothing.
    Hp = _round_up(H, _LANE)
    Dp = _round_up(D_out, _LANE)
    if Hp != H:
        W1 = jnp.pad(W1, ((0, 0), (0, 0), (0, Hp - H)))
        b1 = jnp.pad(b1, ((0, 0), (0, Hp - H)))
        W2 = jnp.pad(W2, ((0, 0), (0, Hp - H), (0, 0)))
    if Dp != D_out:
        W2 = jnp.pad(W2, ((0, 0), (0, 0), (0, Dp - D_out)))
        b2 = jnp.pad(b2, ((0, 0), (0, Dp - D_out)))
    b1 = b1.reshape(C, 1, Hp)   # leading-axis gather + broadcast over T rows
    b2 = b2.reshape(C, 1, Dp)

    # --- Generation-aware VMEM budget.  On v7x each of the two TensorCores
    # holds its own copy of any resident table in its private 64 MiB, so the
    # budget is deliberately per-TC.
    cap = _vmem_capacity_bytes()
    budget = max(cap - 24 * _MiB, cap // 2)     # working-set budget
    vmem_cap = cap - 8 * _MiB                   # hard clamp on vmem_limit_bytes

    wdt = compute_dtype
    # Resident footprint: tables single-buffered (constant index_map +
    # pl.Buffered(1)); x / out blocks double-buffered by the pipeline.
    table_bytes = (_tiled_bytes((C, D_in, Hp), wdt)
                   + _tiled_bytes((C, Hp, Dp), wdt)
                   + _tiled_bytes((C, 1, Hp), jnp.float32)
                   + _tiled_bytes((C, 1, Dp), jnp.float32))

    def act_bytes(t_blk):
        return 2 * (_tiled_bytes((1, t_blk, D_in), wdt)
                    + _tiled_bytes((1, t_blk, Dp), out_dtype))

    # --- Path + T-tile selection.
    t_blk = None
    if force_path != "streamed":
        for cand in _tile_candidates(T):
            if table_bytes + act_bytes(cand) <= budget:
                t_blk = cand
                break
        if t_blk is None and force_path == "resident":
            t_blk = min(_tile_candidates(T))
    use_resident = t_blk is not None

    if use_resident:
        n_t = T // t_blk
        footprint = table_bytes + act_bytes(t_blk)

        def resident_spec(shape):
            # Constant index_map + single buffer: the per-category table is
            # DMA'd into VMEM exactly once for the whole grid.
            return pl.BlockSpec(shape, lambda bi, ti, cid: (0, 0, 0),
                                pipeline_mode=pl.Buffered(1))

        in_specs = [
            pl.BlockSpec((1, t_blk, D_in), lambda bi, ti, cid: (bi, ti, 0)),
            resident_spec((C, D_in, Hp)),
            resident_spec((C, 1, Hp)),
            resident_spec((C, Hp, Dp)),
            resident_spec((C, 1, Dp)),
        ]
        out_specs = pl.BlockSpec((1, t_blk, Dp), lambda bi, ti, cid: (bi, ti, 0))
        grid_spec = pltpu.PrefetchScalarGridSpec(
            num_scalar_prefetch=1, grid=(B, n_t),
            in_specs=in_specs, out_specs=out_specs)
        kernel = _mlp_kernel_resident
        args = (cat_ids, x, W1, b1, W2, b2)
    else:
        # Streamed: per-step weight DMA gathered by sorted category ids; the
        # permutation lives entirely in the x/out index_maps (no wrapper
        # gather/scatter HBM passes).
        order = jnp.argsort(cat_ids).astype(jnp.int32)
        cid_sorted = jnp.take(cat_ids, order).astype(jnp.int32)

        w_slab = (_tiled_bytes((1, D_in, Hp), wdt)
                  + _tiled_bytes((1, Hp, Dp), wdt))
        bias_tbl = (_tiled_bytes((C, 1, Hp), jnp.float32)
                    + _tiled_bytes((C, 1, Dp), jnp.float32))
        t_blk, depth = None, None
        for cand in _tile_candidates(T):      # prefer a fatter M tile first...
            for d in (3, 2):                  # ...then deeper weight buffering
                if d * w_slab + bias_tbl + act_bytes(cand) <= budget:
                    t_blk, depth = cand, d
                    break
            if t_blk is not None:
                break
        if t_blk is None:
            # TODO(synk): reduction-tiled (D_in / H) fallback for weight slabs
            # larger than VMEM; for now take the smallest tile / shallowest depth.
            t_blk, depth = min(_tile_candidates(T)), 2
        n_t = T // t_blk
        depth = max(1, min(depth, B * n_t))   # never more buffers than grid steps
        footprint = depth * w_slab + bias_tbl + act_bytes(t_blk)

        in_specs = [
            pl.BlockSpec((1, t_blk, D_in),
                         lambda bi, ti, cs, od: (od[bi], ti, 0)),
            pl.BlockSpec((1, D_in, Hp),
                         lambda bi, ti, cs, od: (cs[bi], 0, 0),
                         pipeline_mode=pl.Buffered(depth)),
            pl.BlockSpec((C, 1, Hp), lambda bi, ti, cs, od: (0, 0, 0),
                         pipeline_mode=pl.Buffered(1)),     # biases resident
            pl.BlockSpec((1, Hp, Dp),
                         lambda bi, ti, cs, od: (cs[bi], 0, 0),
                         pipeline_mode=pl.Buffered(depth)),
            pl.BlockSpec((C, 1, Dp), lambda bi, ti, cs, od: (0, 0, 0),
                         pipeline_mode=pl.Buffered(1)),
        ]
        out_specs = pl.BlockSpec((1, t_blk, Dp),
                                 lambda bi, ti, cs, od: (od[bi], ti, 0))
        grid_spec = pltpu.PrefetchScalarGridSpec(
            num_scalar_prefetch=2, grid=(B, n_t),
            in_specs=in_specs, out_specs=out_specs)
        kernel = _mlp_kernel_streamed
        args = (cid_sorted, order, x, W1, b1, W2, b2)

    vmem_limit = int(min(max(footprint + 4 * _MiB, 32 * _MiB), vmem_cap))

    out_padded = pl.pallas_call(
        kernel,
        out_shape=jax.ShapeDtypeStruct((B, T, Dp), out_dtype),
        grid_spec=grid_spec,
        compiler_params=pltpu.CompilerParams(
            # Every (batch-row, T-tile) step is independent: both axes parallel
            # so v7x's two TensorCores split the loop (neutral on v5e/v6e).
            dimension_semantics=("parallel", "parallel"),
            vmem_limit_bytes=vmem_limit,
        ),
    )(*args)

    return out_padded if Dp == D_out else out_padded[:, :, :D_out]


def _reference(x, cat_ids, W1, b1, W2, b2):
    # Pure-JAX reference mirroring the PyTorch module exactly.
    sW1 = W1[cat_ids]            # (B, D_in, H)
    sb1 = b1[cat_ids]            # (B, H)
    h = jnp.einsum("btd,bdh->bth", x, sW1) + sb1[:, None, :]
    h = jax.nn.relu(h)
    sW2 = W2[cat_ids]            # (B, H, D_out)
    sb2 = b2[cat_ids]            # (B, D_out)
    return jnp.einsum("bth,bho->bto", h, sW2) + sb2[:, None, :]


if __name__ == "__main__":
    num_categories, input_dim, hidden_dim, output_dim = 3, 16, 32, 16
    B, T = 2, 8

    key = jax.random.PRNGKey(0)
    k_x, k_w1, k_w2, k_b1, k_b2, k_c = jax.random.split(key, 6)

    # Weights match the module's init scale (0.02*randn); biases made nonzero so
    # the bias-broadcast path is actually exercised (they are trainable params).
    W1 = 0.02 * jax.random.normal(
        k_w1, (num_categories, input_dim, hidden_dim), jnp.float32)
    b1 = 0.02 * jax.random.normal(
        k_b1, (num_categories, hidden_dim), jnp.float32)
    W2 = 0.02 * jax.random.normal(
        k_w2, (num_categories, hidden_dim, output_dim), jnp.float32)
    b2 = 0.02 * jax.random.normal(
        k_b2, (num_categories, output_dim), jnp.float32)

    x = jax.random.normal(k_x, (B, T, input_dim), jnp.float32)
    cat_ids = jax.random.randint(k_c, (B,), 0, num_categories, jnp.int32)

    ref = _reference(x, cat_ids, W1, b1, W2, b2)

    # Default heuristic path (resident weight table at these shapes).
    out = jax.block_until_ready(category_specific_mlp(x, cat_ids, W1, b1, W2, b2))
    assert out.shape == (B, T, output_dim)
    assert jnp.allclose(out, ref, atol=1e-5, rtol=1e-5), "resident path mismatch"

    # Force-exercise the streamed (per-step weight DMA, sorted-index) path too.
    out_s = jax.block_until_ready(
        category_specific_mlp(x, cat_ids, W1, b1, W2, b2, force_path="streamed"))
    assert jnp.allclose(out_s, ref, atol=1e-5, rtol=1e-5), "streamed path mismatch"

    print("KERNEL_OK")
</pallas_src>

<mosaic_0001>
module attributes {stable_mosaic.version = 11 : i64} {
  func.func @_mlp_kernel_resident(%arg0: i32, %arg1: i32, %arg2: memref<2xi32, #tpu.memory_space<smem>>, %arg3: memref<1x8x16xf32, #tpu.memory_space<vmem>>, %arg4: memref<3x16x128xf32, #tpu.memory_space<vmem>>, %arg5: memref<3x1x128xf32, #tpu.memory_space<vmem>>, %arg6: memref<3x128x128xf32, #tpu.memory_space<vmem>>, %arg7: memref<3x1x128xf32, #tpu.memory_space<vmem>>, %arg8: memref<1x8x128xf32, #tpu.memory_space<vmem>>) attributes {dimension_semantics = [#tpu.dimension_semantics<parallel>, #tpu.dimension_semantics<parallel>], iteration_bounds = array<i64: 2, 1>, scalar_prefetch = 1 : i64, scratch_operands = 0 : i64, tpu.core_type = #tpu.core_type<tc>, window_params = [{transform_indices = @transform_0, window_bounds = array<i64: 1, 8, 16>}, {pipeline_mode = #tpu.pipeline_mode<synchronous>, transform_indices = @transform_1, window_bounds = array<i64: 3, 16, 128>}, {pipeline_mode = #tpu.pipeline_mode<synchronous>, transform_indices = @transform_2, window_bounds = array<i64: 3, 1, 128>}, {pipeline_mode = #tpu.pipeline_mode<synchronous>, transform_indices = @transform_3, window_bounds = array<i64: 3, 128, 128>}, {pipeline_mode = #tpu.pipeline_mode<synchronous>, transform_indices = @transform_4, window_bounds = array<i64: 3, 1, 128>}, {transform_indices = @transform_5, window_bounds = array<i64: 1, 8, 128>}]} {
    %0 = arith.index_cast %arg0 : i32 to index
    %1 = memref.load %arg2[%0] : memref<2xi32, #tpu.memory_space<smem>>
    %c0 = arith.constant 0 : index
    %c0_0 = arith.constant 0 : index
    %c0_1 = arith.constant 0 : index
    %2 = vector.load %arg3[%c0, %c0_0, %c0_1] : memref<1x8x16xf32, #tpu.memory_space<vmem>>, vector<1x8x16xf32>
    %3 = vector.shape_cast %2 : vector<1x8x16xf32> to vector<8x16xf32>
    %4 = arith.index_cast %1 : i32 to index
    %c0_2 = arith.constant 0 : index
    %c0_3 = arith.constant 0 : index
    %5 = vector.load %arg4[%4, %c0_2, %c0_3] : memref<3x16x128xf32, #tpu.memory_space<vmem>>, vector<1x16x128xf32>
    %6 = vector.shape_cast %5 : vector<1x16x128xf32> to vector<16x128xf32>
    %cst = arith.constant dense<0.000000e+00> : vector<8x128xf32>
    %7 = tpu.matmul %3, %6, %cst {dimension_numbers = #tpu.dot_dimension_numbers<[1], [0], [0], [1], [0, 0, 1, 1], [], []>} : vector<8x16xf32>, vector<16x128xf32>, vector<8x128xf32> -> vector<8x128xf32>
    %8 = arith.index_cast %1 : i32 to index
    %c0_4 = arith.constant 0 : index
    %c0_5 = arith.constant 0 : index
    %9 = vector.load %arg5[%8, %c0_4, %c0_5] : memref<3x1x128xf32, #tpu.memory_space<vmem>>, vector<1x1x128xf32>
    %10 = vector.shape_cast %9 : vector<1x1x128xf32> to vector<1x128xf32>
    %11 = vector.broadcast %10 : vector<1x128xf32> to vector<8x128xf32>
    %12 = arith.addf %7, %11 : vector<8x128xf32>
    %cst_6 = arith.constant 0.000000e+00 : f32
    %13 = vector.broadcast %cst_6 : f32 to vector<8x128xf32>
    %14 = arith.maximumf %12, %13 : vector<8x128xf32>
    %15 = arith.index_cast %1 : i32 to index
    %c0_7 = arith.constant 0 : index
    %c0_8 = arith.constant 0 : index
    %16 = vector.load %arg6[%15, %c0_7, %c0_8] : memref<3x128x128xf32, #tpu.memory_space<vmem>>, vector<1x128x128xf32>
    %17 = vector.shape_cast %16 : vector<1x128x128xf32> to vector<128x128xf32>
    %cst_9 = arith.constant dense<0.000000e+00> : vector<8x128xf32>
    %18 = tpu.matmul %14, %17, %cst_9 {dimension_numbers = #tpu.dot_dimension_numbers<[1], [0], [0], [1], [0, 0, 1, 1], [], []>} : vector<8x128xf32>, vector<128x128xf32>, vector<8x128xf32> -> vector<8x128xf32>
    %19 = arith.index_cast %1 : i32 to index
    %c0_10 = arith.constant 0 : index
    %c0_11 = arith.constant 0 : index
    %20 = vector.load %arg7[%19, %c0_10, %c0_11] : memref<3x1x128xf32, #tpu.memory_space<vmem>>, vector<1x1x128xf32>
    %21 = vector.shape_cast %20 : vector<1x1x128xf32> to vector<1x128xf32>
    %22 = vector.broadcast %21 : vector<1x128xf32> to vector<8x128xf32>
    %23 = arith.addf %18, %22 : vector<8x128xf32>
    %c0_12 = arith.constant 0 : index
    %c0_13 = arith.constant 0 : index
    %c0_14 = arith.constant 0 : index
    %24 = vector.load %arg8[%c0_12, %c0_13, %c0_14] : memref<1x8x128xf32, #tpu.memory_space<vmem>>, vector<1x8x128xf32>
    %25 = vector.shape_cast %24 : vector<1x8x128xf32> to vector<8x128xf32>
    %26 = vector.shape_cast %23 : vector<8x128xf32> to vector<1x8x128xf32>
    tpu.vector_store %arg8[%c0_12, %c0_13, %c0_14], %26 {strides = array<i32>} : memref<1x8x128xf32, #tpu.memory_space<vmem>>, vector<1x8x128xf32>,
    return
  }
  func.func @transform_0(%arg0: i32, %arg1: i32, %arg2: memref<2xi32, #tpu.memory_space<smem>>) -> (i32, i32, i32) {
    %c0_i32 = arith.constant 0 : i32
    %c0_i32_0 = arith.constant 0 : i32
    return %arg0, %arg1, %c0_i32 : i32, i32, i32
  }
  func.func @transform_1(%arg0: i32, %arg1: i32, %arg2: memref<2xi32, #tpu.memory_space<smem>>) -> (i32, i32, i32) {
    %c0_i32 = arith.constant 0 : i32
    %c0_i32_0 = arith.constant 0 : i32
    %c0_i32_1 = arith.constant 0 : i32
    %c0_i32_2 = arith.constant 0 : i32
    return %c0_i32, %c0_i32_0, %c0_i32_1 : i32, i32, i32
  }
  func.func @transform_2(%arg0: i32, %arg1: i32, %arg2: memref<2xi32, #tpu.memory_space<smem>>) -> (i32, i32, i32) {
    %c0_i32 = arith.constant 0 : i32
    %c0_i32_0 = arith.constant 0 : i32
    %c0_i32_1 = arith.constant 0 : i32
    %c0_i32_2 = arith.constant 0 : i32
    return %c0_i32, %c0_i32_0, %c0_i32_1 : i32, i32, i32
  }
  func.func @transform_3(%arg0: i32, %arg1: i32, %arg2: memref<2xi32, #tpu.memory_space<smem>>) -> (i32, i32, i32) {
    %c0_i32 = arith.constant 0 : i32
    %c0_i32_0 = arith.constant 0 : i32
    %c0_i32_1 = arith.constant 0 : i32
    %c0_i32_2 = arith.constant 0 : i32
    return %c0_i32, %c0_i32_0, %c0_i32_1 : i32, i32, i32
  }
  func.func @transform_4(%arg0: i32, %arg1: i32, %arg2: memref<2xi32, #tpu.memory_space<smem>>) -> (i32, i32, i32) {
    %c0_i32 = arith.constant 0 : i32
    %c0_i32_0 = arith.constant 0 : i32
    %c0_i32_1 = arith.constant 0 : i32
    %c0_i32_2 = arith.constant 0 : i32
    return %c0_i32, %c0_i32_0, %c0_i32_1 : i32, i32, i32
  }
  func.func @transform_5(%arg0: i32, %arg1: i32, %arg2: memref<2xi32, #tpu.memory_space<smem>>) -> (i32, i32, i32) {
    %c0_i32 = arith.constant 0 : i32
    %c0_i32_0 = arith.constant 0 : i32
    return %arg0, %arg1, %c0_i32 : i32, i32, i32
  }
}

</mosaic_0001>

<llo_original>
// kernel: tpu_custom_call.1
$region0: #{tpu_custom_call.1}
  #allocation0 [shape = 'u32[]', space=smem, size = 0x4, offset = 0x4, fixed_abs, tag = 'smem constant byte address 0x4 - core index']
  #allocation1 [shape = 'u32[144,128]{1,0:T(1,128)}', space=vmem, size = 0x12000, scoped, tag = 'internal scratch']
  #allocation2 [shape = 's32[1]{0}', space=sflag, size = 0x4, scoped, tag = 'scoped memory for tpu_custom_call.1']
  #allocation3 [shape = 'u8[512]{0}', space=smem, size = 0x200, scoped, tag = 'prefetched SMEM operand 0']
  %s0 = inlined_call_operand.hbm [shape: s32[2], index: 0, kind: input, shape index: {}]
  %s1 = inlined_call_operand.hbm [shape: f32[2,8,16], index: 1, kind: input, shape index: {}]
  %s2 = inlined_call_operand.hbm [shape: f32[3,16,128], index: 2, kind: input, shape index: {}]
  %s3 = inlined_call_operand.vmem [shape: f32[3,1,128], index: 3, kind: input, shape index: {}]
  %s4 = inlined_call_operand.hbm [shape: f32[3,128,128], index: 4, kind: input, shape index: {}]
  %s5 = inlined_call_operand.vmem [shape: f32[3,1,128], index: 5, kind: input, shape index: {}]
  %s6 = inlined_call_operand.hbm [shape: f32[2,8,128], index: 6, kind: output, shape index: {}]
  %s7 = sld [smem:[#allocation0]]
  $region65: #{tpu_custom_call.1} parent=0
    _
  %s9 = ssub.s32 1, %s7
  %s10 = scalar_select 0, %s9, %s7
  %12 = dma.hbm_to_smem %s0, 16, [#allocation3], [#allocation2]
  %13 = dma.done [#allocation2], 16
  %14 = sfence
  $region1: #{tpu_custom_call.1} parent=0
    #allocation4 [shape = 'u8[8192]{0}', space=vmem, size = 0x2000, scoped, tag = 'input window, operand 1']
    #allocation5 [shape = 's32[2]{0}', space=sflag, size = 0x8, scoped, tag = 'scoped memory for tpu_custom_call.1']
    #allocation6 [shape = 's32[2]{0}', space=sflag, size = 0x8, scoped, tag = 'scoped memory for tpu_custom_call.1']
    #allocation7 [shape = 'u8[24576]{0}', space=vmem, size = 0x6000, scoped, tag = 'input window, operand 2, single buffered']
    #allocation8 [shape = 's32[1]{0}', space=sflag, size = 0x4, scoped, tag = 'scoped memory for tpu_custom_call.1']
    #allocation9 [shape = 'u8[196608]{0}', space=vmem, size = 0x30000, scoped, tag = 'input window, operand 4, single buffered']
    #allocation10 [shape = 'u8[8192]{0}', space=vmem, size = 0x2000, scoped, tag = 'output window, operand 0']
    %15 = vsyncpa [#allocation5], 0
    %s16 = scalar_lea.sflag [#allocation5], 1
    %17 = vsyncpa %s16, 0
    %18 = vsyncpa [#allocation8], 0
    %19 = vsyncpa [#allocation6], 0
    %s20 = scalar_lea.sflag [#allocation6], 1
    %21 = vsyncpa %s20, 0
    loop: start=0, step=1, limit=4
    $region2: #{tpu_custom_call.1} parent=1 // loop_pre_header
      _
    $region3: #{tpu_custom_call.1} parent=1 // loop_header
      %s23 = sphi 0, %s27
      %p24 = scmp.ge.s32.totalorder %s23, 4
      %s30 = sphi 0, %s42
      %s31 = sphi 0, %s38
      %s32 = sphi 0, %s30
      %s33 = sphi 0, %s31
      %s34 = sphi 0, %s32
      %s35 = sphi 0, %s33
      %s47 = sphi 0, %s49
      %s50 = sphi 0, %s47
      %s51 = sphi 0, %s50
      %s67 = sphi 0, %s51
      %s71 = sphi 0, %s71
      %s73 = sphi 0, %s71
      %s74 = sphi 0, %s73
      %s88 = sphi 0, %s74
      %s92 = sphi 0, %s92
      %s94 = sphi 0, %s92
      %s95 = sphi 0, %s94
      %s109 = sphi 0, %s95
      %s113 = sphi 0, %s113
      %s115 = sphi 0, %s113
      %s116 = sphi 0, %s115
      %s130 = sphi 0, %s116
      %s134 = sphi 0, %s134
      %s136 = sphi 0, %s134
      %s137 = sphi 0, %s136
      %s151 = sphi 0, %s137
      %s159 = sphi 0, %s161
      %s162 = sphi 0, %s159
      %s163 = sphi 0, %s162
      %s179 = sphi 0, %s163
    $region4: #{tpu_custom_call.1} parent=1 // loop_header_branch
      %26 = sbr.rel (%p24) target = $region8
    $region5: #{tpu_custom_call.1} parent=1 // loop_body
      %s28 = ssub.s32 %s23, 1
      %s29 = ssub.s32 %s23, 2
      %s36 = sadd.s32 1, %s31
      %p37 = scmp.ge.s32.totalorder %s36, 1
      %s38 = scalar_select %p37, 0, %s36
      %s39 = sadd.s32 1, %s30
      %s40 = scalar_select %p37, %s39, %s30
      %p41 = scmp.ge.s32.totalorder %s40, 2
      %s42 = scalar_select %p41, 0, %s40
      %s43 = ssub.s32 %s30, %s42
      %s44 = ssub.s32 %s31, %s38
      %s45 = sor.u32 %s43, %s44
      %p46 = scmp.eq.s32.totalorder %s45, 0
      %s48 = sadd.s32 %s47, 1
      %s49 = scalar_select %p46, %s47, %s48
      %p52 = pneg %p46
      %p53 = scmp.eq.s32.totalorder %s23, 1
      %p54 = por %p52, %p53
      %p55 = scmp.ne.s32.totalorder %s47, %s50
      %p56 = scmp.eq.s32.totalorder %s23, 0
      %p57 = por %p55, %p56
      %p58 = scmp.ne.s32.totalorder %s47, %s50
      %p59 = scmp.eq.s32.totalorder %s28, 1
      %p60 = por %p58, %p59
      %p61 = scmp.ne.s32.totalorder %s50, %s51
      %p62 = scmp.eq.s32.totalorder %s28, 0
      %p63 = por %p61, %p62
      %p64 = scmp.ne.s32.totalorder %s50, %s51
      %p65 = scmp.eq.s32.totalorder %s29, 1
      %p66 = por %p64, %p65
      %p68 = scmp.ne.s32.totalorder %s51, %s67
      %p69 = scmp.eq.s32.totalorder %s29, 0
      %p70 = por %p68, %p69
      %s72 = sadd.s32 %s71, 1
      %p75 = scmp.eq.s32.totalorder %s23, 1
      %p76 = scmp.ne.s32.totalorder %s71, %s73
      %p77 = scmp.eq.s32.totalorder %s23, 0
      %p78 = por %p76, %p77
      %p79 = scmp.ne.s32.totalorder %s71, %s73
      %p80 = scmp.eq.s32.totalorder %s28, 1
      %p81 = por %p79, %p80
      %p82 = scmp.ne.s32.totalorder %s73, %s74
      %p83 = scmp.eq.s32.totalorder %s28, 0
      %p84 = por %p82, %p83
      %p85 = scmp.ne.s32.totalorder %s73, %s74
      %p86 = scmp.eq.s32.totalorder %s29, 1
      %p87 = por %p85, %p86
      %p89 = scmp.ne.s32.totalorder %s74, %s88
      %p90 = scmp.eq.s32.totalorder %s29, 0
      %p91 = por %p89, %p90
      %s93 = sadd.s32 %s92, 1
      %p96 = scmp.eq.s32.totalorder %s23, 1
      %p97 = scmp.ne.s32.totalorder %s92, %s94
      %p98 = scmp.eq.s32.totalorder %s23, 0
      %p99 = por %p97, %p98
      %p100 = scmp.ne.s32.totalorder %s92, %s94
      %p101 = scmp.eq.s32.totalorder %s28, 1
      %p102 = por %p100, %p101
      %p103 = scmp.ne.s32.totalorder %s94, %s95
      %p104 = scmp.eq.s32.totalorder %s28, 0
      %p105 = por %p103, %p104
      %p106 = scmp.ne.s32.totalorder %s94, %s95
      %p107 = scmp.eq.s32.totalorder %s29, 1
      %p108 = por %p106, %p107
      %p110 = scmp.ne.s32.totalorder %s95, %s109
      %p111 = scmp.eq.s32.totalorder %s29, 0
      %p112 = por %p110, %p111
      %s114 = sadd.s32 %s113, 1
      %p117 = scmp.eq.s32.totalorder %s23, 1
      %p118 = scmp.ne.s32.totalorder %s113, %s115
      %p119 = scmp.eq.s32.totalorder %s23, 0
      %p120 = por %p118, %p119
      %p121 = scmp.ne.s32.totalorder %s113, %s115
      %p122 = scmp.eq.s32.totalorder %s28, 1
      %p123 = por %p121, %p122
      %p124 = scmp.ne.s32.totalorder %s115, %s116
      %p125 = scmp.eq.s32.totalorder %s28, 0
      %p126 = por %p124, %p125
      %p127 = scmp.ne.s32.totalorder %s115, %s116
      %p128 = scmp.eq.s32.totalorder %s29, 1
      %p129 = por %p127, %p128
      %p131 = scmp.ne.s32.totalorder %s116, %s130
      %p132 = scmp.eq.s32.totalorder %s29, 0
      %p133 = por %p131, %p132
      %s135 = sadd.s32 %s134, 1
      %p138 = scmp.eq.s32.totalorder %s23, 1
      %p139 = scmp.ne.s32.totalorder %s134, %s136
      %p140 = scmp.eq.s32.totalorder %s23, 0
      %p141 = por %p139, %p140
      %p142 = scmp.ne.s32.totalorder %s134, %s136
      %p143 = scmp.eq.s32.totalorder %s28, 1
      %p144 = por %p142, %p143
      %p145 = scmp.ne.s32.totalorder %s136, %s137
      %p146 = scmp.eq.s32.totalorder %s28, 0
      %p147 = por %p145, %p146
      %p148 = scmp.ne.s32.totalorder %s136, %s137
      %p149 = scmp.eq.s32.totalorder %s29, 1
      %p150 = por %p148, %p149
      %p152 = scmp.ne.s32.totalorder %s137, %s151
      %p153 = scmp.eq.s32.totalorder %s29, 0
      %p154 = por %p152, %p153
      %s155 = ssub.s32 %s30, %s42
      %s156 = ssub.s32 %s31, %s38
      %s157 = sor.u32 %s155, %s156
      %p158 = scmp.eq.s32.totalorder %s157, 0
      %s160 = sadd.s32 %s159, 1
      %s161 = scalar_select %p158, %s159, %s160
      %p164 = pneg %p158
      %p165 = scmp.eq.s32.totalorder %s23, 1
      %p166 = por %p164, %p165
      %p167 = scmp.ne.s32.totalorder %s159, %s162
      %p168 = scmp.eq.s32.totalorder %s23, 0
      %p169 = por %p167, %p168
      %p170 = scmp.ne.s32.totalorder %s159, %s162
      %p171 = scmp.eq.s32.totalorder %s28, 1
      %p172 = por %p170, %p171
      %p173 = scmp.ne.s32.totalorder %s162, %s163
      %p174 = scmp.eq.s32.totalorder %s28, 0
      %p175 = por %p173, %p174
      %p176 = scmp.ne.s32.totalorder %s162, %s163
      %p177 = scmp.eq.s32.totalorder %s29, 1
      %p178 = por %p176, %p177
      %p180 = scmp.ne.s32.totalorder %s163, %s179
      %p181 = scmp.eq.s32.totalorder %s29, 0
      %p182 = por %p180, %p181
      %p183 = scmp.le.s32.totalorder 1, %s23
      %p184 = scmp.lt.s32.totalorder %s23, 3
      %p185 = pnand %p183, %p184
      %p186 = pneg %p185
      // Predicated region
      $region9: #{tpu_custom_call.1} parent=5 // pred_check
        _
      $region10: #{tpu_custom_call.1} parent=5 // pred_check_branch
        %188 = sbr.rel (%p185) target = $region12
      $region11: #{tpu_custom_call.1} parent=5 // pred_region
        %s189 = ssub.s32 %s23, 1
        // Predicated region
        $region13: #{tpu_custom_call.1} parent=11 // pred_check
          %p190 = pneg %p84
        $region14: #{tpu_custom_call.1} parent=11 // pred_check_branch
          %192 = sbr.rel (%p190) target = $region16
        $region15: #{tpu_custom_call.1} parent=11 // pred_region
          %s194 = ssub.s32 768, 768
          %195 = vsyncadd [#allocation8], %s194
          %s196 = sshll.u32 [#allocation7], 4
          %s197 = int_to_ptr.vmem [resolvable:$true] %s196
          %202 = dma.hbm_to_vmem [thread:$0]  %s2, 768, %s197, [#allocation8], 128, 128, 8
        $region16: #{tpu_custom_call.1} parent=11 // pred_fallthru
          _
        // Predicated region
        $region17: #{tpu_custom_call.1} parent=11 // pred_check
          %p203 = pneg %p105
        $region18: #{tpu_custom_call.1} parent=11 // pred_check_branch
          %205 = sbr.rel (%p203) target = $region20
        $region19: #{tpu_custom_call.1} parent=11 // pred_region
          _
        $region20: #{tpu_custom_call.1} parent=11 // pred_fallthru
          _
        // Predicated region
        $region21: #{tpu_custom_call.1} parent=11 // pred_check
          %p206 = pneg %p126
        $region22: #{tpu_custom_call.1} parent=11 // pred_check_branch
          %208 = sbr.rel (%p206) target = $region24
        $region23: #{tpu_custom_call.1} parent=11 // pred_region
          %s210 = ssub.s32 6144, 6144
          %211 = vsyncadd [#allocation8], %s210
          %s212 = sshll.u32 [#allocation9], 4
          %s213 = int_to_ptr.vmem [resolvable:$true] %s212
          %218 = dma.hbm_to_vmem [thread:$0]  %s4, 6144, %s213, [#allocation8], 128, 128, 8
        $region24: #{tpu_custom_call.1} parent=11 // pred_fallthru
          _
        // Predicated region
        $region25: #{tpu_custom_call.1} parent=11 // pred_check
          %p219 = pneg %p147
        $region26: #{tpu_custom_call.1} parent=11 // pred_check_branch
          %221 = sbr.rel (%p219) target = $region28
        $region27: #{tpu_custom_call.1} parent=11 // pred_region
          _
        $region28: #{tpu_custom_call.1} parent=11 // pred_fallthru
          _
      $region12: #{tpu_custom_call.1} parent=5 // pred_fallthru
        _
      %p222 = scmp.lt.s32.totalorder %s23, 2
      // Predicated region
      $region29: #{tpu_custom_call.1} parent=5 // pred_check
        %p223 = pneg %p222
      $region30: #{tpu_custom_call.1} parent=5 // pred_check_branch
        %225 = sbr.rel (%p223) target = $region32
      $region31: #{tpu_custom_call.1} parent=5 // pred_region
        // Predicated region
        $region33: #{tpu_custom_call.1} parent=31 // pred_check
          %p226 = pneg %p57
        $region34: #{tpu_custom_call.1} parent=31 // pred_check_branch
          %228 = sbr.rel (%p226) target = $region36
        $region35: #{tpu_custom_call.1} parent=31 // pred_region
          %s229 = sand.u32 %s47, 1
          %s230 = scalar_lea.sflag [#allocation5], %s229
          %s231 = sand.u32 %s47, 1
          %s232 = smul.addr %s231, 8
          %s233 = scalar_lea.vmem [#allocation4], %s232
          %s235 = ssub.s32 128, 128
          %236 = vsyncadd %s230, %s235
          %s237 = sadd.s32 %s31, %s30
          %s238 = smul.addr %s237, 128
          %s239 = scalar_lea.hbm %s1, %s238
          %s241 = sshll.u32 %s233, 4
          %s242 = int_to_ptr.vmem [resolvable:$true] %s241
          %244 = dma.hbm_to_vmem [thread:$0]  %s239, 128, %s242, %s230
        $region36: #{tpu_custom_call.1} parent=31 // pred_fallthru
          _
      $region32: #{tpu_custom_call.1} parent=5 // pred_fallthru
        _
      %p245 = scmp.le.s32.totalorder 1, %s23
      %p246 = scmp.lt.s32.totalorder %s23, 3
      %p247 = pnand %p245, %p246
      %p248 = pneg %p247
      // Predicated region
      $region37: #{tpu_custom_call.1} parent=5 // pred_check
        _
      $region38: #{tpu_custom_call.1} parent=5 // pred_check_branch
        %250 = sbr.rel (%p247) target = $region40
      $region39: #{tpu_custom_call.1} parent=5 // pred_region
        %s251 = ssub.s32 %s23, 1
        %s252 = sand.u32 %s50, 1
        %s253 = scalar_lea.sflag [#allocation5], %s252
        %s254 = sand.u32 %s50, 1
        %s255 = smul.addr %s254, 8
        %s256 = scalar_lea.vmem [#allocation4], %s255
        // Predicated region
        $region41: #{tpu_custom_call.1} parent=39 // pred_check
          %p257 = pneg %p63
        $region42: #{tpu_custom_call.1} parent=39 // pred_check_branch
          %259 = sbr.rel (%p257) target = $region44
        $region43: #{tpu_custom_call.1} parent=39 // pred_region
          %260 = dma.done %s253, 128
        $region44: #{tpu_custom_call.1} parent=39 // pred_fallthru
          _
        // Predicated region
        $region45: #{tpu_custom_call.1} parent=39 // pred_check
          %p261 = pneg %p84
        $region46: #{tpu_custom_call.1} parent=39 // pred_check_branch
          %263 = sbr.rel (%p261) target = $region48
        $region47: #{tpu_custom_call.1} parent=39 // pred_region
          %264 = dma.done [#allocation8], 768
        $region48: #{tpu_custom_call.1} parent=39 // pred_fallthru
          _
        // Predicated region
        $region49: #{tpu_custom_call.1} parent=39 // pred_check
          %p265 = pneg %p126
        $region50: #{tpu_custom_call.1} parent=39 // pred_check_branch
          %267 = sbr.rel (%p265) target = $region52
        $region51: #{tpu_custom_call.1} parent=39 // pred_region
          %268 = dma.done [#allocation8], 6144
        $region52: #{tpu_custom_call.1} parent=39 // pred_fallthru
          _
        %s269 = sand.u32 %s50, 1
        %s270 = scalar_lea.sflag [#allocation5], %s269
        %s271 = sand.u32 %s50, 1
        %s272 = smul.addr %s271, 8
        %s273 = scalar_lea.vmem [#allocation4], %s272
        %p274 = pneg %p63
        %p275 = pneg %p60
        %p276 = pneg %p84
        %p277 = pneg %p81
        %p278 = pneg %p105
        %p279 = pneg %p102
        %p280 = pneg %p126
        %p281 = pneg %p123
        %p282 = pneg %p147
        %p283 = pneg %p144
        %p284 = pneg %p175
        %p285 = pneg %p172
        %s286 = sand.u32 %s162, 1
        %s287 = scalar_lea.sflag [#allocation6], %s286
        %s288 = sand.u32 %s162, 1
        %s289 = smul.addr %s288, 8
        %s290 = scalar_lea.vmem [#allocation10], %s289
        %s291 = sld [smem:[#allocation3 + %s32]]
        %v292 = vld [vmem:[%s256] sm:$0xff]
        %s293 = smul.u32 %s291, 16
        %s294 = scalar_lea.vmem [#allocation7], %s293
        %v295 = vld [vmem:[%s294] sm:$0xff]
        %v296 = vld [vmem:[%s294 + $0x8] sm:$0xff]
        %s297 = scalar_lea.vmem %s3, %s291
        %v298 = vld [vmem:[%s297] sm:$0x1]
        %v300 = vlaneseq
        %v301 = vshrl.u32 %v300, 7
        %v302 = vsub.s32 0, %v301
        %v303 = vrot.slane %v298, %v302
        %vm305 = vcmask 130048
        %v307 = vsel %vm305, %v292, 0
        %309 = vmatprep.subr.mxu0 0.0
        %310 = vmatpush1.msra.mxu0 %v295
        %311 = vmatprep.subr.mxu0 0.0
        %312 = vmatpush1.msra.mxu0 %v296
        %313 = vmatprep.subr.mxu0 0.0
        %314 = vmatpush1.msra.mxu0 0.0
        %315 = vmatprep.subr.mxu0 0.0
        %316 = vmatpush1.msra.mxu0 0.0
        %317 = vmatprep.subr.mxu0 0.0
        %318 = vmatpush1.msra.mxu0 0.0
        %319 = vmatprep.subr.mxu0 0.0
        %320 = vmatpush1.msra.mxu0 0.0
        %321 = vmatprep.subr.mxu0 0.0
        %322 = vmatpush1.msra.mxu0 0.0
        %323 = vmatprep.subr.mxu0 0.0
        %324 = vmatpush1.msra.mxu0 0.0
        %325 = vmatprep.subr.mxu0 0.0
        %326 = vmatpush1.msra.mxu0 0.0
        %327 = vmatprep.subr.mxu0 0.0
        %328 = vmatpush1.msra.mxu0 0.0
        %329 = vmatprep.subr.mxu0 0.0
        %330 = vmatpush1.msra.mxu0 0.0
        %331 = vmatprep.subr.mxu0 0.0
        %332 = vmatpush1.msra.mxu0 0.0
        %333 = vmatprep.subr.mxu0 0.0
        %334 = vmatpush1.msra.mxu0 0.0
        %335 = vmatprep.subr.mxu0 0.0
        %336 = vmatpush1.msra.mxu0 0.0
        %337 = vmatprep.subr.mxu0 0.0
        %338 = vmatpush1.msra.mxu0 0.0
        %339 = vmatprep.subr.mxu0 0.0
        %340 = vmatpush1.msra.mxu0 0.0
        %341 = vmatprep.subr.mxu0 0.0
        %342 = vmatpush1.msra.mxu0 0.0
        %343 = vmatprep.subr.mxu0 0.0
        %344 = vmatpush1.msra.mxu0 0.0
        %345 = vmatprep.subr.mxu0 0.0
        %346 = vmatpush1.msra.mxu0 0.0
        %347 = vmatprep.subr.mxu0 0.0
        %348 = vmatpush1.msra.mxu0 0.0
        %349 = vmatprep.subr.mxu0 0.0
        %350 = vmatpush1.msra.mxu0 0.0
        %351 = vmatprep.subr.mxu0 0.0
        %352 = vmatpush1.msra.mxu0 0.0
        %353 = vmatprep.subr.mxu0 0.0
        %354 = vmatpush1.msra.mxu0 0.0
        %355 = vmatprep.subr.mxu0 0.0
        %356 = vmatpush1.msra.mxu0 0.0
        %357 = vmatprep.subr.mxu0 0.0
        %358 = vmatpush1.msra.mxu0 0.0
        %359 = vmatprep.subr.mxu0 0.0
        %360 = vmatpush1.msra.mxu0 0.0
        %361 = vmatprep.subr.mxu0 0.0
        %362 = vmatpush1.msra.mxu0 0.0
        %363 = vmatprep.subr.mxu0 0.0
        %364 = vmatpush1.msra.mxu0 0.0
        %365 = vmatprep.subr.mxu0 0.0
        %366 = vmatpush1.msra.mxu0 0.0
        %367 = vmatprep.subr.mxu0 0.0
        %368 = vmatpush1.msra.mxu0 0.0
        %369 = vmatprep.subr.mxu0 0.0
        %370 = vmatpush1.msra.mxu0 0.0
        %371 = vmatprep.subr.mxu0 0.0
        %372 = vmatpush1.msra.mxu0 0.0
        %373 = vmatprep.mubr.f32.mxu0 0.0
        %374 = vmatmul.mubr.f32.gmra.mrb[0].mxu0 %v307
        %v375 = vpop.f32.mrb[0].mxu0
        %v376 = vadd.f32 %v303, %v375
        %v377 = vpop.f32.mrb[0].mxu0
        %378 = vdwg.mxu0
        %v379 = vmax.f32 %v376, 0.0
        %s380 = smul.u32 %s291, 128
        %s381 = scalar_lea.vmem [#allocation9], %s380
        %v382 = vld [vmem:[%s381] sm:$0xff]
        %v383 = vld [vmem:[%s381 + $0x8] sm:$0xff]
        %v384 = vld [vmem:[%s381 + $0x10] sm:$0xff]
        %v385 = vld [vmem:[%s381 + $0x18] sm:$0xff]
        %v386 = vld [vmem:[%s381 + $0x20] sm:$0xff]
        %v387 = vld [vmem:[%s381 + $0x28] sm:$0xff]
        %v388 = vld [vmem:[%s381 + $0x30] sm:$0xff]
        %v389 = vld [vmem:[%s381 + $0x38] sm:$0xff]
        %v390 = vld [vmem:[%s381 + $0x40] sm:$0xff]
        %v391 = vld [vmem:[%s381 + $0x48] sm:$0xff]
        %v392 = vld [vmem:[%s381 + $0x50] sm:$0xff]
        %v393 = vld [vmem:[%s381 + $0x58] sm:$0xff]
        %v394 = vld [vmem:[%s381 + $0x60] sm:$0xff]
        %v395 = vld [vmem:[%s381 + $0x68] sm:$0xff]
        %v396 = vld [vmem:[%s381 + $0x70] sm:$0xff]
        %v397 = vld [vmem:[%s381 + $0x78] sm:$0xff]
        %s398 = scalar_lea.vmem %s5, %s291
        %v399 = vld [vmem:[%s398] sm:$0x1]
        %v401 = vlaneseq
        %v402 = vshrl.u32 %v401, 7
        %v403 = vsub.s32 0, %v402
        %v404 = vrot.slane %v399, %v403
        %406 = vmatprep.subr.mxu0 0.0
        %407 = vmatpush1.msra.mxu0 %v382
        %408 = vmatprep.subr.mxu0 0.0
        %409 = vmatpush1.msra.mxu0 %v383
        %410 = vmatprep.subr.mxu0 0.0
        %411 = vmatpush1.msra.mxu0 %v384
        %412 = vmatprep.subr.mxu0 0.0
        %413 = vmatpush1.msra.mxu0 %v385
        %414 = vmatprep.subr.mxu0 0.0
        %415 = vmatpush1.msra.mxu0 %v386
        %416 = vmatprep.subr.mxu0 0.0
        %417 = vmatpush1.msra.mxu0 %v387
        %418 = vmatprep.subr.mxu0 0.0
        %419 = vmatpush1.msra.mxu0 %v388
        %420 = vmatprep.subr.mxu0 0.0
        %421 = vmatpush1.msra.mxu0 %v389
        %422 = vmatprep.subr.mxu0 0.0
        %423 = vmatpush1.msra.mxu0 %v390
        %424 = vmatprep.subr.mxu0 0.0
        %425 = vmatpush1.msra.mxu0 %v391
        %426 = vmatprep.subr.mxu0 0.0
        %427 = vmatpush1.msra.mxu0 %v392
        %428 = vmatprep.subr.mxu0 0.0
        %429 = vmatpush1.msra.mxu0 %v393
        %430 = vmatprep.subr.mxu0 0.0
        %431 = vmatpush1.msra.mxu0 %v394
        %432 = vmatprep.subr.mxu0 0.0
        %433 = vmatpush1.msra.mxu0 %v395
        %434 = vmatprep.subr.mxu0 0.0
        %435 = vmatpush1.msra.mxu0 %v396
        %436 = vmatprep.subr.mxu0 0.0
        %437 = vmatpush1.msra.mxu0 %v397
        %438 = vmatprep.subr.mxu0 0.0
        %439 = vmatpush1.msra.mxu0 0.0
        %440 = vmatprep.subr.mxu0 0.0
        %441 = vmatpush1.msra.mxu0 0.0
        %442 = vmatprep.subr.mxu0 0.0
        %443 = vmatpush1.msra.mxu0 0.0
        %444 = vmatprep.subr.mxu0 0.0
        %445 = vmatpush1.msra.mxu0 0.0
        %446 = vmatprep.subr.mxu0 0.0
        %447 = vmatpush1.msra.mxu0 0.0
        %448 = vmatprep.subr.mxu0 0.0
        %449 = vmatpush1.msra.mxu0 0.0
        %450 = vmatprep.subr.mxu0 0.0
        %451 = vmatpush1.msra.mxu0 0.0
        %452 = vmatprep.subr.mxu0 0.0
        %453 = vmatpush1.msra.mxu0 0.0
        %454 = vmatprep.subr.mxu0 0.0
        %455 = vmatpush1.msra.mxu0 0.0
        %456 = vmatprep.subr.mxu0 0.0
        %457 = vmatpush1.msra.mxu0 0.0
        %458 = vmatprep.subr.mxu0 0.0
        %459 = vmatpush1.msra.mxu0 0.0
        %460 = vmatprep.subr.mxu0 0.0
        %461 = vmatpush1.msra.mxu0 0.0
        %462 = vmatprep.subr.mxu0 0.0
        %463 = vmatpush1.msra.mxu0 0.0
        %464 = vmatprep.subr.mxu0 0.0
        %465 = vmatpush1.msra.mxu0 0.0
        %466 = vmatprep.subr.mxu0 0.0
        %467 = vmatpush1.msra.mxu0 0.0
        %468 = vmatprep.subr.mxu0 0.0
        %469 = vmatpush1.msra.mxu0 0.0
        %470 = vmatprep.mubr.f32.mxu0 0.0
        %471 = vmatmul.mubr.f32.gmra.mrb[0].mxu0 %v379
        %v472 = vpop.f32.mrb[0].mxu0
        %v473 = vadd.f32 %v404, %v472
        %v474 = vpop.f32.mrb[0].mxu0
        %475 = vdwg.mxu0
        %476 = vst [vmem:[%s290] sm:$0xff] %v473
        %s477 = sand.u32 %s162, 1
        %s478 = scalar_lea.sflag [#allocation6], %s477
        %s479 = sand.u32 %s162, 1
        %s480 = smul.addr %s479, 8
        %s481 = scalar_lea.vmem [#allocation10], %s480
        // Predicated region
        $region53: #{tpu_custom_call.1} parent=39 // pred_check
          %p482 = pneg %p172
        $region54: #{tpu_custom_call.1} parent=39 // pred_check_branch
          %484 = sbr.rel (%p482) target = $region56
        $region55: #{tpu_custom_call.1} parent=39 // pred_region
          %s486 = ssub.s32 128, 128
          %487 = vsyncadd %s478, %s486
          %s488 = sadd.s32 %s33, %s32
          %s489 = smul.addr %s488, 128
          %s490 = scalar_lea.hbm %s6, %s489
          %s492 = sshll.u32 %s481, 4
          %s493 = int_to_ptr.vmem [resolvable:$true] %s492
          %495 = dma.vmem_to_hbm [thread:$0]  %s493, 128, %s490, %s478
        $region56: #{tpu_custom_call.1} parent=39 // pred_fallthru
          _
      $region40: #{tpu_custom_call.1} parent=5 // pred_fallthru
        _
      %p496 = scmp.le.s32.totalorder 2, %s23
      // Predicated region
      $region57: #{tpu_custom_call.1} parent=5 // pred_check
        %p497 = pneg %p496
      $region58: #{tpu_custom_call.1} parent=5 // pred_check_branch
        %499 = sbr.rel (%p497) target = $region60
      $region59: #{tpu_custom_call.1} parent=5 // pred_region
        %s500 = ssub.s32 %s23, 2
        // Predicated region
        $region61: #{tpu_custom_call.1} parent=59 // pred_check
          %p501 = pneg %p178
        $region62: #{tpu_custom_call.1} parent=59 // pred_check_branch
          %503 = sbr.rel (%p501) target = $region64
        $region63: #{tpu_custom_call.1} parent=59 // pred_region
          %s504 = sand.u32 %s163, 1
          %s505 = scalar_lea.sflag [#allocation6], %s504
          %s506 = sand.u32 %s163, 1
          %s507 = smul.addr %s506, 8
          %s508 = scalar_lea.vmem [#allocation10], %s507
          %509 = dma.done %s505, 128
        $region64: #{tpu_custom_call.1} parent=59 // pred_fallthru
          _
      $region60: #{tpu_custom_call.1} parent=5 // pred_fallthru
        _
    $region6: #{tpu_custom_call.1} parent=1 // loop_footer
      %s27 = sadd.s32 1, %s23
    $region7: #{tpu_custom_call.1} parent=1 // loop_footer_branch
      %22 = sbr.rel target = $region3
    $region8: #{tpu_custom_call.1} parent=1 // loop_exit
      _
    %510 = vsyncpa [#allocation5], 1
    %s511 = scalar_lea.sflag [#allocation5], 1
    %512 = vsyncpa %s511, 1
    %513 = vsyncpa [#allocation8], 1
    %514 = vsyncpa [#allocation6], 1
    %s515 = scalar_lea.sflag [#allocation6], 1
    %516 = vsyncpa %s515, 1

</llo_original>
